<compile_context>
chip_gen: v5e
topology: v5e:2x2
jax: 0.10.0
libtpu: 0.0.40
codegen_flags: <defaults>
</compile_context>

<pallas_src>
import functools

import jax
import jax.numpy as jnp
import numpy as np
from jax.experimental import pallas as pl
from jax.experimental.pallas import tpu as pltpu

_LANE = 128        # TPU lane width: class dim padded to this for lane-dense stores
_NEG_BIG = -1e30   # finite "minus infinity" for padded class logits (never NaN)


# ----------------------------- fused Pallas kernel -------------------------- #

def _fdpnn_kernel(x_ref,
                  w1_ref, b1_ref,
                  w2_ref, b2_ref,
                  w3_ref, b3_ref,
                  w4_ref, b4_ref,
                  o_ref):
    # MXU operands in bf16 (native path on v5e/v6e/v7x), accumulation in f32.
    x = x_ref[...].astype(jnp.bfloat16)

    # Linear(D,128) + ReLU
    h = jnp.dot(x, w1_ref[...], preferred_element_type=jnp.float32)
    h = jnp.maximum(h + b1_ref[...], 0.0)
    # Linear(128,256) + ReLU
    h = jnp.dot(h.astype(jnp.bfloat16), w2_ref[...],
                preferred_element_type=jnp.float32)
    h = jnp.maximum(h + b2_ref[...], 0.0)
    # Linear(256,128) + ReLU
    h = jnp.dot(h.astype(jnp.bfloat16), w3_ref[...],
                preferred_element_type=jnp.float32)
    h = jnp.maximum(h + b3_ref[...], 0.0)
    # Linear(128, C_pad=128) + Softmax over the padded (lane-dense) class dim.
    logits = jnp.dot(h.astype(jnp.bfloat16), w4_ref[...],
                     preferred_element_type=jnp.float32)
    logits = logits + b4_ref[...]            # padded lanes get -1e30 -> exp == 0
    m = jnp.max(logits, axis=-1, keepdims=True)
    e = jnp.exp(logits - m)
    inv = pl.reciprocal(jnp.sum(e, axis=-1, keepdims=True), approx=False)
    o_ref[...] = e * inv                     # full-vreg, unmasked store


# ------------------------------- wrappers ------------------------------------ #

def prepare_params(torch_style_params, num_classes):
    """One-time prep:
       - PyTorch nn.Linear weight (out,in) -> (in,out),
       - pad the class dim of layer-4 to 128 lanes (zero weights, -1e30 bias),
       - cast matmul weights to bf16 (f32 accumulation in-kernel),
       - biases stay f32 (bias-add / ReLU / softmax run in f32)."""
    w1, b1, w2, b2, w3, b3, w4, b4 = torch_style_params
    w4p = jnp.zeros((_LANE, w4.shape[1]), jnp.float32).at[:num_classes].set(w4)
    b4p = jnp.full((_LANE,), _NEG_BIG, jnp.float32).at[:num_classes].set(b4)
    return (w1.T.astype(jnp.bfloat16), b1.reshape(1, -1).astype(jnp.float32),
            w2.T.astype(jnp.bfloat16), b2.reshape(1, -1).astype(jnp.float32),
            w3.T.astype(jnp.bfloat16), b3.reshape(1, -1).astype(jnp.float32),
            w4p.T.astype(jnp.bfloat16), b4p.reshape(1, -1).astype(jnp.float32))


def _round_up(v, m):
    return (v + m - 1) // m * m


@functools.partial(jax.jit, static_argnames=("num_classes",))
def fdpnn_forward(x, prepared_params, num_classes):
    w1, b1, w2, b2, w3, b3, w4, b4 = prepared_params
    B = x.shape[0]
    D = w1.shape[0]

    # nn.Flatten(): (B, H, W) -> (B, H*W)   (pure layout, fuses into the jit)
    xf = x.reshape(B, -1).astype(jnp.float32)

    # Batch tiling: small batches run in one step; large batches use 512-row
    # tiles (multiple of 256 -> full MXU M passes on v6e/v7x, fine on v5e).
    tb = _round_up(B, 8) if B <= 512 else 512
    bp = _round_up(B, tb)
    if bp != B:
        xf = jnp.pad(xf, ((0, bp - B), (0, 0)))

    resident = lambda shape: pl.BlockSpec(shape, lambda i: (0, 0))  # stays in VMEM

    out = pl.pallas_call(
        _fdpnn_kernel,
        out_shape=jax.ShapeDtypeStruct((bp, _LANE), jnp.float32),
        grid_spec=pltpu.PrefetchScalarGridSpec(
            num_scalar_prefetch=0,
            grid=(bp // tb,),
            in_specs=[
                pl.BlockSpec((tb, D), lambda i: (i, 0)),      # x tile (pipelined)
                resident(w1.shape), resident(b1.shape),
                resident(w2.shape), resident(b2.shape),
                resident(w3.shape), resident(b3.shape),
                resident(w4.shape), resident(b4.shape),
            ],
            out_specs=pl.BlockSpec((tb, _LANE), lambda i: (i, 0)),
        ),
        compiler_params=pltpu.CompilerParams(
            dimension_semantics=("parallel",)),   # megacore batch sharding (v7x)
    )(xf, w1, b1, w2, b2, w3, b3, w4, b4)

    return out[:B, :num_classes]


# ------------------------ pure-JAX reference (check) ------------------------ #

def reference(x, torch_style_params):
    w1, b1, w2, b2, w3, b3, w4, b4 = torch_style_params
    h = x.reshape(x.shape[0], -1)
    h = jax.nn.relu(h @ w1.T + b1)
    h = jax.nn.relu(h @ w2.T + b2)
    h = jax.nn.relu(h @ w3.T + b3)
    logits = h @ w4.T + b4
    return jax.nn.softmax(logits, axis=1)


if __name__ == "__main__":
    # data_shape = (8, 16) -> np.multiply(*data_shape) = 128 input features
    B, H, W = 2, 8, 16
    D = H * W
    num_classes = 4

    key = jax.random.PRNGKey(0)
    ks = jax.random.split(key, 9)
    # PyTorch-layout parameters: nn.Linear(in, out) stores weight as (out, in)
    w1 = jax.random.normal(ks[0], (128, D), jnp.float32) * 0.05
    b1 = jax.random.normal(ks[1], (128,), jnp.float32) * 0.05
    w2 = jax.random.normal(ks[2], (256, 128), jnp.float32) * 0.05
    b2 = jax.random.normal(ks[3], (256,), jnp.float32) * 0.05
    w3 = jax.random.normal(ks[4], (128, 256), jnp.float32) * 0.05
    b3 = jax.random.normal(ks[5], (128,), jnp.float32) * 0.05
    w4 = jax.random.normal(ks[6], (num_classes, 128), jnp.float32) * 0.05
    b4 = jax.random.normal(ks[7], (num_classes,), jnp.float32) * 0.05
    x = jax.random.normal(ks[8], (B, H, W), jnp.float32)

    torch_style_params = (w1, b1, w2, b2, w3, b3, w4, b4)
    prepared = prepare_params(torch_style_params, num_classes)  # one-time layout/dtype prep

    out = jax.block_until_ready(fdpnn_forward(x, prepared, num_classes))
    ref = jax.block_until_ready(reference(x, torch_style_params))

    assert out.shape == (B, num_classes)
    # bf16 MXU operands (f32 accumulation) vs an all-f32 reference: allow the
    # bf16-operand error budget, which is far below the padded-softmax scale.
    np.testing.assert_allclose(np.asarray(out), np.asarray(ref), rtol=2e-2, atol=2e-2)
    # rows still sum to 1 (padded class lanes contribute exactly exp(-1e30)=0)
    np.testing.assert_allclose(np.asarray(out).sum(axis=1), np.ones(B),
                               rtol=1e-5, atol=1e-5)
    print("KERNEL_OK")
</pallas_src>

<mosaic_0001>
module attributes {stable_mosaic.version = 11 : i64} {
  func.func @_fdpnn_kernel(%arg0: i32, %arg1: memref<8x128xf32, #tpu.memory_space<vmem>>, %arg2: memref<128x128xbf16, #tpu.memory_space<vmem>>, %arg3: memref<1x128xf32, #tpu.memory_space<vmem>>, %arg4: memref<128x256xbf16, #tpu.memory_space<vmem>>, %arg5: memref<1x256xf32, #tpu.memory_space<vmem>>, %arg6: memref<256x128xbf16, #tpu.memory_space<vmem>>, %arg7: memref<1x128xf32, #tpu.memory_space<vmem>>, %arg8: memref<128x128xbf16, #tpu.memory_space<vmem>>, %arg9: memref<1x128xf32, #tpu.memory_space<vmem>>, %arg10: memref<8x128xf32, #tpu.memory_space<vmem>>) attributes {dimension_semantics = [#tpu.dimension_semantics<parallel>], iteration_bounds = array<i64: 1>, scalar_prefetch = 0 : i64, scratch_operands = 0 : i64, tpu.core_type = #tpu.core_type<tc>, window_params = [{transform_indices = @transform_0, window_bounds = array<i64: 8, 128>}, {pipeline_mode = #tpu.pipeline_mode<synchronous>, transform_indices = @transform_1, window_bounds = array<i64: 128, 128>}, {pipeline_mode = #tpu.pipeline_mode<synchronous>, transform_indices = @transform_2, window_bounds = array<i64: 1, 128>}, {pipeline_mode = #tpu.pipeline_mode<synchronous>, transform_indices = @transform_3, window_bounds = array<i64: 128, 256>}, {pipeline_mode = #tpu.pipeline_mode<synchronous>, transform_indices = @transform_4, window_bounds = array<i64: 1, 256>}, {pipeline_mode = #tpu.pipeline_mode<synchronous>, transform_indices = @transform_5, window_bounds = array<i64: 256, 128>}, {pipeline_mode = #tpu.pipeline_mode<synchronous>, transform_indices = @transform_6, window_bounds = array<i64: 1, 128>}, {pipeline_mode = #tpu.pipeline_mode<synchronous>, transform_indices = @transform_7, window_bounds = array<i64: 128, 128>}, {pipeline_mode = #tpu.pipeline_mode<synchronous>, transform_indices = @transform_8, window_bounds = array<i64: 1, 128>}, {transform_indices = @transform_9, window_bounds = array<i64: 8, 128>}]} {
    %c0 = arith.constant 0 : index
    %c0_0 = arith.constant 0 : index
    %0 = vector.load %arg1[%c0, %c0_0] : memref<8x128xf32, #tpu.memory_space<vmem>>, vector<8x128xf32>
    %1 = arith.truncf %0 : vector<8x128xf32> to vector<8x128xbf16>
    %c0_1 = arith.constant 0 : index
    %c0_2 = arith.constant 0 : index
    %2 = vector.load %arg2[%c0_1, %c0_2] : memref<128x128xbf16, #tpu.memory_space<vmem>>, vector<128x128xbf16>
    %cst = arith.constant dense<0.000000e+00> : vector<8x128xf32>
    %3 = tpu.matmul %1, %2, %cst {dimension_numbers = #tpu.dot_dimension_numbers<[1], [0], [0], [1], [0, 0, 1, 1], [], []>} : vector<8x128xbf16>, vector<128x128xbf16>, vector<8x128xf32> -> vector<8x128xf32>
    %c0_3 = arith.constant 0 : index
    %c0_4 = arith.constant 0 : index
    %4 = vector.load %arg3[%c0_3, %c0_4] : memref<1x128xf32, #tpu.memory_space<vmem>>, vector<1x128xf32>
    %5 = vector.broadcast %4 : vector<1x128xf32> to vector<8x128xf32>
    %6 = arith.addf %3, %5 : vector<8x128xf32>
    %cst_5 = arith.constant 0.000000e+00 : f32
    %7 = vector.broadcast %cst_5 : f32 to vector<8x128xf32>
    %8 = arith.maximumf %6, %7 : vector<8x128xf32>
    %9 = arith.truncf %8 : vector<8x128xf32> to vector<8x128xbf16>
    %c0_6 = arith.constant 0 : index
    %c0_7 = arith.constant 0 : index
    %10 = vector.load %arg4[%c0_6, %c0_7] : memref<128x256xbf16, #tpu.memory_space<vmem>>, vector<128x256xbf16>
    %cst_8 = arith.constant dense<0.000000e+00> : vector<8x256xf32>
    %11 = tpu.matmul %9, %10, %cst_8 {dimension_numbers = #tpu.dot_dimension_numbers<[1], [0], [0], [1], [0, 0, 1, 1], [], []>} : vector<8x128xbf16>, vector<128x256xbf16>, vector<8x256xf32> -> vector<8x256xf32>
    %c0_9 = arith.constant 0 : index
    %c0_10 = arith.constant 0 : index
    %12 = vector.load %arg5[%c0_9, %c0_10] : memref<1x256xf32, #tpu.memory_space<vmem>>, vector<1x256xf32>
    %13 = vector.broadcast %12 : vector<1x256xf32> to vector<8x256xf32>
    %14 = arith.addf %11, %13 : vector<8x256xf32>
    %cst_11 = arith.constant 0.000000e+00 : f32
    %15 = vector.broadcast %cst_11 : f32 to vector<8x256xf32>
    %16 = arith.maximumf %14, %15 : vector<8x256xf32>
    %17 = arith.truncf %16 : vector<8x256xf32> to vector<8x256xbf16>
    %c0_12 = arith.constant 0 : index
    %c0_13 = arith.constant 0 : index
    %18 = vector.load %arg6[%c0_12, %c0_13] : memref<256x128xbf16, #tpu.memory_space<vmem>>, vector<256x128xbf16>
    %cst_14 = arith.constant dense<0.000000e+00> : vector<8x128xf32>
    %19 = tpu.matmul %17, %18, %cst_14 {dimension_numbers = #tpu.dot_dimension_numbers<[1], [0], [0], [1], [0, 0, 1, 1], [], []>} : vector<8x256xbf16>, vector<256x128xbf16>, vector<8x128xf32> -> vector<8x128xf32>
    %c0_15 = arith.constant 0 : index
    %c0_16 = arith.constant 0 : index
    %20 = vector.load %arg7[%c0_15, %c0_16] : memref<1x128xf32, #tpu.memory_space<vmem>>, vector<1x128xf32>
    %21 = vector.broadcast %20 : vector<1x128xf32> to vector<8x128xf32>
    %22 = arith.addf %19, %21 : vector<8x128xf32>
    %cst_17 = arith.constant 0.000000e+00 : f32
    %23 = vector.broadcast %cst_17 : f32 to vector<8x128xf32>
    %24 = arith.maximumf %22, %23 : vector<8x128xf32>
    %25 = arith.truncf %24 : vector<8x128xf32> to vector<8x128xbf16>
    %c0_18 = arith.constant 0 : index
    %c0_19 = arith.constant 0 : index
    %26 = vector.load %arg8[%c0_18, %c0_19] : memref<128x128xbf16, #tpu.memory_space<vmem>>, vector<128x128xbf16>
    %cst_20 = arith.constant dense<0.000000e+00> : vector<8x128xf32>
    %27 = tpu.matmul %25, %26, %cst_20 {dimension_numbers = #tpu.dot_dimension_numbers<[1], [0], [0], [1], [0, 0, 1, 1], [], []>} : vector<8x128xbf16>, vector<128x128xbf16>, vector<8x128xf32> -> vector<8x128xf32>
    %c0_21 = arith.constant 0 : index
    %c0_22 = arith.constant 0 : index
    %28 = vector.load %arg9[%c0_21, %c0_22] : memref<1x128xf32, #tpu.memory_space<vmem>>, vector<1x128xf32>
    %29 = vector.broadcast %28 : vector<1x128xf32> to vector<8x128xf32>
    %30 = arith.addf %27, %29 : vector<8x128xf32>
    %cst_23 = arith.constant dense<0xFF800000> : vector<8xf32>
    %31 = vector.multi_reduction <maximumf>, %30, %cst_23 [1] : vector<8x128xf32> to vector<8xf32>
    %32 = vector.shape_cast %31 : vector<8xf32> to vector<8x1xf32>
    %33 = vector.broadcast %32 : vector<8x1xf32> to vector<8x128xf32>
    %34 = arith.subf %30, %33 : vector<8x128xf32>
    %35 = math.exp %34 : vector<8x128xf32>
    %cst_24 = arith.constant dense<0.000000e+00> : vector<8xf32>
    %36 = vector.multi_reduction <add>, %35, %cst_24 [1] : vector<8x128xf32> to vector<8xf32>
    %37 = vector.shape_cast %36 : vector<8xf32> to vector<8x1xf32>
    %38 = tpu.reciprocal %37 : vector<8x1xf32> -> vector<8x1xf32>
    %39 = vector.broadcast %38 : vector<8x1xf32> to vector<8x128xf32>
    %40 = arith.mulf %35, %39 : vector<8x128xf32>
    %c0_25 = arith.constant 0 : index
    %c0_26 = arith.constant 0 : index
    %41 = vector.load %arg10[%c0_25, %c0_26] : memref<8x128xf32, #tpu.memory_space<vmem>>, vector<8x128xf32>
    tpu.vector_store %arg10[%c0_25, %c0_26], %40 {strides = array<i32>} : memref<8x128xf32, #tpu.memory_space<vmem>>, vector<8x128xf32>,
    return
  }
  func.func @transform_0(%arg0: i32) -> (i32, i32) {
    %c0_i32 = arith.constant 0 : i32
    %c0_i32_0 = arith.constant 0 : i32
    return %arg0, %c0_i32 : i32, i32
  }
  func.func @transform_1(%arg0: i32) -> (i32, i32) {
    %c0_i32 = arith.constant 0 : i32
    %c0_i32_0 = arith.constant 0 : i32
    %c0_i32_1 = arith.constant 0 : i32
    return %c0_i32, %c0_i32_0 : i32, i32
  }
  func.func @transform_2(%arg0: i32) -> (i32, i32) {
    %c0_i32 = arith.constant 0 : i32
    %c0_i32_0 = arith.constant 0 : i32
    %c0_i32_1 = arith.constant 0 : i32
    return %c0_i32, %c0_i32_0 : i32, i32
  }
  func.func @transform_3(%arg0: i32) -> (i32, i32) {
    %c0_i32 = arith.constant 0 : i32
    %c0_i32_0 = arith.constant 0 : i32
    %c0_i32_1 = arith.constant 0 : i32
    return %c0_i32, %c0_i32_0 : i32, i32
  }
  func.func @transform_4(%arg0: i32) -> (i32, i32) {
    %c0_i32 = arith.constant 0 : i32
    %c0_i32_0 = arith.constant 0 : i32
    %c0_i32_1 = arith.constant 0 : i32
    return %c0_i32, %c0_i32_0 : i32, i32
  }
  func.func @transform_5(%arg0: i32) -> (i32, i32) {
    %c0_i32 = arith.constant 0 : i32
    %c0_i32_0 = arith.constant 0 : i32
    %c0_i32_1 = arith.constant 0 : i32
    return %c0_i32, %c0_i32_0 : i32, i32
  }
  func.func @transform_6(%arg0: i32) -> (i32, i32) {
    %c0_i32 = arith.constant 0 : i32
    %c0_i32_0 = arith.constant 0 : i32
    %c0_i32_1 = arith.constant 0 : i32
    return %c0_i32, %c0_i32_0 : i32, i32
  }
  func.func @transform_7(%arg0: i32) -> (i32, i32) {
    %c0_i32 = arith.constant 0 : i32
    %c0_i32_0 = arith.constant 0 : i32
    %c0_i32_1 = arith.constant 0 : i32
    return %c0_i32, %c0_i32_0 : i32, i32
  }
  func.func @transform_8(%arg0: i32) -> (i32, i32) {
    %c0_i32 = arith.constant 0 : i32
    %c0_i32_0 = arith.constant 0 : i32
    %c0_i32_1 = arith.constant 0 : i32
    return %c0_i32, %c0_i32_0 : i32, i32
  }
  func.func @transform_9(%arg0: i32) -> (i32, i32) {
    %c0_i32 = arith.constant 0 : i32
    %c0_i32_0 = arith.constant 0 : i32
    return %arg0, %c0_i32 : i32, i32
  }
}

</mosaic_0001>

<llo_original>
// kernel: fdpnn_forward.1
$region0: #{fdpnn_forward.1}
  #allocation0 [shape = 'u32[]', space=smem, size = 0x4, offset = 0x4, fixed_abs, tag = 'smem constant byte address 0x4 - core index']
  #allocation1 [shape = 'u32[72,128]{1,0:T(1,128)}', space=vmem, size = 0x9000, scoped, tag = 'internal scratch']
  %s0 = inlined_call_operand.vmem [shape: f32[8,128], index: 0, kind: input, shape index: {}]
  %s1 = inlined_call_operand.hbm [shape: bf16[128,128], index: 1, kind: input, shape index: {}]
  %s2 = inlined_call_operand.vmem [shape: f32[1,128], index: 2, kind: input, shape index: {}]
  %s3 = inlined_call_operand.hbm [shape: bf16[128,256], index: 3, kind: input, shape index: {}]
  %s4 = inlined_call_operand.vmem [shape: f32[1,256], index: 4, kind: input, shape index: {}]
  %s5 = inlined_call_operand.hbm [shape: bf16[256,128], index: 5, kind: input, shape index: {}]
  %s6 = inlined_call_operand.vmem [shape: f32[1,128], index: 6, kind: input, shape index: {}]
  %s7 = inlined_call_operand.hbm [shape: bf16[128,128], index: 7, kind: input, shape index: {}]
  %s8 = inlined_call_operand.vmem [shape: f32[1,128], index: 8, kind: input, shape index: {}]
  %s9 = inlined_call_operand.vmem [shape: f32[8,128], index: 9, kind: output, shape index: {}]
  %s10 = sld [smem:[#allocation0]]
  $region62: #{fdpnn_forward.1} parent=0
    _
  %s12 = ssub.s32 1, %s10
  %s13 = scalar_select 0, %s12, %s10
  $region1: #{fdpnn_forward.1} parent=0
    #allocation2 [shape = 'u8[32768]{0}', space=vmem, size = 0x8000, scoped, tag = 'input window, operand 1, single buffered']
    #allocation3 [shape = 's32[1]{0}', space=sflag, size = 0x4, scoped, tag = 'scoped memory for fdpnn_forward.1']
    #allocation4 [shape = 'u8[65536]{0}', space=vmem, size = 0x10000, scoped, tag = 'input window, operand 3, single buffered']
    #allocation5 [shape = 's32[1]{0}', space=sflag, size = 0x4, scoped, tag = 'scoped memory for fdpnn_forward.1']
    #allocation6 [shape = 'u8[65536]{0}', space=vmem, size = 0x10000, scoped, tag = 'input window, operand 5, single buffered']
    #allocation7 [shape = 'u8[32768]{0}', space=vmem, size = 0x8000, scoped, tag = 'input window, operand 7, single buffered']
    #allocation8 [shape = 's32[1]{0}', space=sflag, size = 0x4, scoped, tag = 'scoped memory for fdpnn_forward.1']
    %14 = vsyncpa [#allocation3], 0
    %15 = vsyncpa [#allocation5], 0
    %16 = vsyncpa [#allocation8], 0
    // Predicated region
    $region2: #{fdpnn_forward.1} parent=1 // pred_check
      _
    $region3: #{fdpnn_forward.1} parent=1 // pred_check_branch
      %18 = sbr.rel (0) target = $region5
    $region4: #{fdpnn_forward.1} parent=1 // pred_region
      _
    $region5: #{fdpnn_forward.1} parent=1 // pred_fallthru
      _
    // Predicated region
    $region6: #{fdpnn_forward.1} parent=1 // pred_check
      _
    $region7: #{fdpnn_forward.1} parent=1 // pred_check_branch
      %20 = sbr.rel (0) target = $region9
    $region8: #{fdpnn_forward.1} parent=1 // pred_region
      %22 = vsyncadd [#allocation3], 0
      %s23 = sshll.u32 %s1, 4
      %s24 = int_to_ptr.hbm [resolvable:$true] %s23
      %s25 = sshll.u32 [#allocation2], 4
      %s26 = int_to_ptr.vmem [resolvable:$true] %s25
      %31 = dma.hbm_to_vmem [thread:$0]  %s24, 1024, %s26, [#allocation3], 64, 64, 4
    $region9: #{fdpnn_forward.1} parent=1 // pred_fallthru
      _
    // Predicated region
    $region10: #{fdpnn_forward.1} parent=1 // pred_check
      _
    $region11: #{fdpnn_forward.1} parent=1 // pred_check_branch
      %33 = sbr.rel (0) target = $region13
    $region12: #{fdpnn_forward.1} parent=1 // pred_region
      _
    $region13: #{fdpnn_forward.1} parent=1 // pred_fallthru
      _
    // Predicated region
    $region14: #{fdpnn_forward.1} parent=1 // pred_check
      _
    $region15: #{fdpnn_forward.1} parent=1 // pred_check_branch
      %35 = sbr.rel (0) target = $region17
    $region16: #{fdpnn_forward.1} parent=1 // pred_region
      %37 = vsyncadd [#allocation5], 0
      %s38 = sshll.u32 %s3, 4
      %s39 = int_to_ptr.hbm [resolvable:$true] %s38
      %s40 = sshll.u32 [#allocation4], 4
      %s41 = int_to_ptr.vmem [resolvable:$true] %s40
      %46 = dma.hbm_to_vmem [thread:$0]  %s39, 2048, %s41, [#allocation5], 128, 128, 8
    $region17: #{fdpnn_forward.1} parent=1 // pred_fallthru
      _
    // Predicated region
    $region18: #{fdpnn_forward.1} parent=1 // pred_check
      _
    $region19: #{fdpnn_forward.1} parent=1 // pred_check_branch
      %48 = sbr.rel (0) target = $region21
    $region20: #{fdpnn_forward.1} parent=1 // pred_region
      _
    $region21: #{fdpnn_forward.1} parent=1 // pred_fallthru
      _
    // Predicated region
    $region22: #{fdpnn_forward.1} parent=1 // pred_check
      _
    $region23: #{fdpnn_forward.1} parent=1 // pred_check_branch
      %50 = sbr.rel (0) target = $region25
    $region24: #{fdpnn_forward.1} parent=1 // pred_region
      %52 = vsyncadd [#allocation5], 0
      %s53 = sshll.u32 %s5, 4
      %s54 = int_to_ptr.hbm [resolvable:$true] %s53
      %s55 = sshll.u32 [#allocation6], 4
      %s56 = int_to_ptr.vmem [resolvable:$true] %s55
      %61 = dma.hbm_to_vmem [thread:$0]  %s54, 2048, %s56, [#allocation5], 64, 64, 4
    $region25: #{fdpnn_forward.1} parent=1 // pred_fallthru
      _
    // Predicated region
    $region26: #{fdpnn_forward.1} parent=1 // pred_check
      _
    $region27: #{fdpnn_forward.1} parent=1 // pred_check_branch
      %63 = sbr.rel (0) target = $region29
    $region28: #{fdpnn_forward.1} parent=1 // pred_region
      _
    $region29: #{fdpnn_forward.1} parent=1 // pred_fallthru
      _
    // Predicated region
    $region30: #{fdpnn_forward.1} parent=1 // pred_check
      _
    $region31: #{fdpnn_forward.1} parent=1 // pred_check_branch
      %65 = sbr.rel (0) target = $region33
    $region32: #{fdpnn_forward.1} parent=1 // pred_region
      %67 = vsyncadd [#allocation8], 0
      %s68 = sshll.u32 %s7, 4
      %s69 = int_to_ptr.hbm [resolvable:$true] %s68
      %s70 = sshll.u32 [#allocation7], 4
      %s71 = int_to_ptr.vmem [resolvable:$true] %s70
      %76 = dma.hbm_to_vmem [thread:$0]  %s69, 1024, %s71, [#allocation8], 64, 64, 4
    $region33: #{fdpnn_forward.1} parent=1 // pred_fallthru
      _
    // Predicated region
    $region34: #{fdpnn_forward.1} parent=1 // pred_check
      _
    $region35: #{fdpnn_forward.1} parent=1 // pred_check_branch
      %78 = sbr.rel (0) target = $region37
    $region36: #{fdpnn_forward.1} parent=1 // pred_region
      _
    $region37: #{fdpnn_forward.1} parent=1 // pred_fallthru
      _
    // Predicated region
    $region38: #{fdpnn_forward.1} parent=1 // pred_check
      _
    $region39: #{fdpnn_forward.1} parent=1 // pred_check_branch
      %80 = sbr.rel (0) target = $region41
    $region40: #{fdpnn_forward.1} parent=1 // pred_region
      %82 = dma.done [#allocation3], 1024
    $region41: #{fdpnn_forward.1} parent=1 // pred_fallthru
      _
    // Predicated region
    $region42: #{fdpnn_forward.1} parent=1 // pred_check
      _
    $region43: #{fdpnn_forward.1} parent=1 // pred_check_branch
      %84 = sbr.rel (0) target = $region45
    $region44: #{fdpnn_forward.1} parent=1 // pred_region
      %86 = dma.done [#allocation5], 2048
    $region45: #{fdpnn_forward.1} parent=1 // pred_fallthru
      _
    // Predicated region
    $region46: #{fdpnn_forward.1} parent=1 // pred_check
      _
    $region47: #{fdpnn_forward.1} parent=1 // pred_check_branch
      %88 = sbr.rel (0) target = $region49
    $region48: #{fdpnn_forward.1} parent=1 // pred_region
      %90 = dma.done [#allocation5], 2048
    $region49: #{fdpnn_forward.1} parent=1 // pred_fallthru
      _
    // Predicated region
    $region50: #{fdpnn_forward.1} parent=1 // pred_check
      _
    $region51: #{fdpnn_forward.1} parent=1 // pred_check_branch
      %92 = sbr.rel (0) target = $region53
    $region52: #{fdpnn_forward.1} parent=1 // pred_region
      %94 = dma.done [#allocation8], 1024
    $region53: #{fdpnn_forward.1} parent=1 // pred_fallthru
      _
    %v95 = vld [vmem:[%s0] sm:$0xff]
    %v96 = vpack.c.bf16 %v95, %v95
    %v97 = vld [vmem:[#allocation2] sm:$0xf]
    %v98 = vld [vmem:[#allocation2 + $0x4] sm:$0xf]
    %v99 = vld [vmem:[#allocation2 + $0x8] sm:$0xf]
    %v100 = vld [vmem:[#allocation2 + $0xc] sm:$0xf]
    %v101 = vld [vmem:[#allocation2 + $0x10] sm:$0xf]
    %v102 = vld [vmem:[#allocation2 + $0x14] sm:$0xf]
    %v103 = vld [vmem:[#allocation2 + $0x18] sm:$0xf]
    %v104 = vld [vmem:[#allocation2 + $0x1c] sm:$0xf]
    %v105 = vld [vmem:[#allocation2 + $0x20] sm:$0xf]
    %v106 = vld [vmem:[#allocation2 + $0x24] sm:$0xf]
    %v107 = vld [vmem:[#allocation2 + $0x28] sm:$0xf]
    %v108 = vld [vmem:[#allocation2 + $0x2c] sm:$0xf]
    %v109 = vld [vmem:[#allocation2 + $0x30] sm:$0xf]
    %v110 = vld [vmem:[#allocation2 + $0x34] sm:$0xf]
    %v111 = vld [vmem:[#allocation2 + $0x38] sm:$0xf]
    %v112 = vld [vmem:[#allocation2 + $0x3c] sm:$0xf]
    %v113 = vld [vmem:[%s2] sm:$0x1]
    %v115 = vperm.slane %v113, 0
    %v133 = vunpack.c.l.b16 %v97
    %v134 = vunpack.c.l.b16 %v98
    %v135 = vunpack.c.l.b16 %v99
    %v136 = vunpack.c.l.b16 %v100
    %v137 = vunpack.c.l.b16 %v101
    %v138 = vunpack.c.l.b16 %v102
    %v139 = vunpack.c.l.b16 %v103
    %v140 = vunpack.c.l.b16 %v104
    %v141 = vunpack.c.l.b16 %v105
    %v142 = vunpack.c.l.b16 %v106
    %v143 = vunpack.c.l.b16 %v107
    %v144 = vunpack.c.l.b16 %v108
    %v145 = vunpack.c.l.b16 %v109
    %v146 = vunpack.c.l.b16 %v110
    %v147 = vunpack.c.l.b16 %v111
    %v148 = vunpack.c.l.b16 %v112
    %v149 = vpack.c.b16 %v134, %v133
    %v150 = vpack.c.b16 %v136, %v135
    %v151 = vpack.c.b16 %v138, %v137
    %v152 = vpack.c.b16 %v140, %v139
    %v153 = vpack.c.b16 %v142, %v141
    %v154 = vpack.c.b16 %v144, %v143
    %v155 = vpack.c.b16 %v146, %v145
    %v156 = vpack.c.b16 %v148, %v147
    %165 = vmatpush.bf16.msra.mxu0 %v156
    %166 = vmatpush.bf16.msra.mxu0 %v155
    %167 = vmatpush.bf16.msra.mxu0 %v154
    %168 = vmatpush.bf16.msra.mxu0 %v153
    %169 = vmatpush.bf16.msra.mxu0 %v152
    %170 = vmatpush.bf16.msra.mxu0 %v151
    %171 = vmatpush.bf16.msra.mxu0 %v150
    %172 = vmatpush.bf16.msra.mxu0 %v149
    %173 = vmatmul.bf16.gmra.mxu0 %v96
    %v174 = vpop.f32.mrf.mxu0
    %v175 = vadd.f32 %v115, %v174
    %v176 = vpop.f32.mrf.mxu0
    %177 = vdwg.mxu0
    %v178 = vmax.f32 %v175, 0.0
    %v179 = vpack.c.bf16 %v178, %v178
    %v180 = vld [vmem:[#allocation4] sm:$0xff]
    %v181 = vld [vmem:[#allocation4 + $0x8] sm:$0xff]
    %v182 = vld [vmem:[#allocation4 + $0x10] sm:$0xff]
    %v183 = vld [vmem:[#allocation4 + $0x18] sm:$0xff]
    %v184 = vld [vmem:[#allocation4 + $0x20] sm:$0xff]
    %v185 = vld [vmem:[#allocation4 + $0x28] sm:$0xff]
    %v186 = vld [vmem:[#allocation4 + $0x30] sm:$0xff]
    %v187 = vld [vmem:[#allocation4 + $0x38] sm:$0xff]
    %v188 = vld [vmem:[#allocation4 + $0x40] sm:$0xff]
    %v189 = vld [vmem:[#allocation4 + $0x48] sm:$0xff]
    %v190 = vld [vmem:[#allocation4 + $0x50] sm:$0xff]
    %v191 = vld [vmem:[#allocation4 + $0x58] sm:$0xff]
    %v192 = vld [vmem:[#allocation4 + $0x60] sm:$0xff]
    %v193 = vld [vmem:[#allocation4 + $0x68] sm:$0xff]
    %v194 = vld [vmem:[#allocation4 + $0x70] sm:$0xff]
    %v195 = vld [vmem:[#allocation4 + $0x78] sm:$0xff]
    %v196 = vld [vmem:[%s4] sm:$0x3]
    %v198 = vperm.slane %v196, 0
    %v199 = vperm.slane %v196, 1
    %v218 = vunpack.c.l.b16 %v180
    %v219 = vunpack.c.h.b16 %v180
    %v220 = vunpack.c.l.b16 %v181
    %v221 = vunpack.c.h.b16 %v181
    %v222 = vunpack.c.l.b16 %v182
    %v223 = vunpack.c.h.b16 %v182
    %v224 = vunpack.c.l.b16 %v183
    %v225 = vunpack.c.h.b16 %v183
    %v226 = vunpack.c.l.b16 %v184
    %v227 = vunpack.c.h.b16 %v184
    %v228 = vunpack.c.l.b16 %v185
    %v229 = vunpack.c.h.b16 %v185
    %v230 = vunpack.c.l.b16 %v186
    %v231 = vunpack.c.h.b16 %v186
    %v232 = vunpack.c.l.b16 %v187
    %v233 = vunpack.c.h.b16 %v187
    %v234 = vunpack.c.l.b16 %v188
    %v235 = vunpack.c.h.b16 %v188
    %v236 = vunpack.c.l.b16 %v189
    %v237 = vunpack.c.h.b16 %v189
    %v238 = vunpack.c.l.b16 %v190
    %v239 = vunpack.c.h.b16 %v190
    %v240 = vunpack.c.l.b16 %v191
    %v241 = vunpack.c.h.b16 %v191
    %v242 = vunpack.c.l.b16 %v192
    %v243 = vunpack.c.h.b16 %v192
    %v244 = vunpack.c.l.b16 %v193
    %v245 = vunpack.c.h.b16 %v193
    %v246 = vunpack.c.l.b16 %v194
    %v247 = vunpack.c.h.b16 %v194
    %v248 = vunpack.c.l.b16 %v195
    %v249 = vunpack.c.h.b16 %v195
    %v250 = vpack.c.b16 %v220, %v218
    %v251 = vpack.c.b16 %v221, %v219
    %v252 = vpack.c.b16 %v224, %v222
    %v253 = vpack.c.b16 %v225, %v223
    %v254 = vpack.c.b16 %v228, %v226
    %v255 = vpack.c.b16 %v229, %v227
    %v256 = vpack.c.b16 %v232, %v230
    %v257 = vpack.c.b16 %v233, %v231
    %v258 = vpack.c.b16 %v236, %v234
    %v259 = vpack.c.b16 %v237, %v235
    %v260 = vpack.c.b16 %v240, %v238
    %v261 = vpack.c.b16 %v241, %v239
    %v262 = vpack.c.b16 %v244, %v242
    %v263 = vpack.c.b16 %v245, %v243
    %v264 = vpack.c.b16 %v248, %v246
    %v265 = vpack.c.b16 %v249, %v247
    %282 = vmatpush.bf16.msra.mxu0 %v264
    %283 = vmatpush.bf16.msra.mxu0 %v262
    %284 = vmatpush.bf16.msra.mxu0 %v260
    %285 = vmatpush.bf16.msra.mxu0 %v258
    %286 = vmatpush.bf16.msra.mxu0 %v256
    %287 = vmatpush.bf16.msra.mxu0 %v254
    %288 = vmatpush.bf16.msra.mxu0 %v252
    %289 = vmatpush.bf16.msra.mxu0 %v250
    %290 = vmatmul.bf16.gmra.mxu0 %v179
    %v291 = vpop.f32.mrf.mxu0
    %v292 = vadd.f32 %v198, %v291
    %v293 = vpop.f32.mrf.mxu0
    %294 = vdwg.mxu0
    %295 = vmatpush.bf16.msra.mxu0 %v265
    %296 = vmatpush.bf16.msra.mxu0 %v263
    %297 = vmatpush.bf16.msra.mxu0 %v261
    %298 = vmatpush.bf16.msra.mxu0 %v259
    %299 = vmatpush.bf16.msra.mxu0 %v257
    %300 = vmatpush.bf16.msra.mxu0 %v255
    %301 = vmatpush.bf16.msra.mxu0 %v253
    %302 = vmatpush.bf16.msra.mxu0 %v251
    %303 = vmatmul.bf16.gmra.mxu0 %v179
    %v304 = vpop.f32.mrf.mxu0
    %v305 = vadd.f32 %v199, %v304
    %v306 = vpop.f32.mrf.mxu0
    %307 = vdwg.mxu0
    %v308 = vmax.f32 %v292, 0.0
    %v309 = vmax.f32 %v305, 0.0
    %v310 = vpack.c.bf16 %v308, %v308
    %v311 = vpack.c.bf16 %v309, %v309
    %v312 = vld [vmem:[#allocation6] sm:$0xf]
    %v313 = vld [vmem:[#allocation6 + $0x4] sm:$0xf]
    %v314 = vld [vmem:[#allocation6 + $0x8] sm:$0xf]
    %v315 = vld [vmem:[#allocation6 + $0xc] sm:$0xf]
    %v316 = vld [vmem:[#allocation6 + $0x10] sm:$0xf]
    %v317 = vld [vmem:[#allocation6 + $0x14] sm:$0xf]
    %v318 = vld [vmem:[#allocation6 + $0x18] sm:$0xf]
    %v319 = vld [vmem:[#allocation6 + $0x1c] sm:$0xf]
    %v320 = vld [vmem:[#allocation6 + $0x20] sm:$0xf]
    %v321 = vld [vmem:[#allocation6 + $0x24] sm:$0xf]
    %v322 = vld [vmem:[#allocation6 + $0x28] sm:$0xf]
    %v323 = vld [vmem:[#allocation6 + $0x2c] sm:$0xf]
    %v324 = vld [vmem:[#allocation6 + $0x30] sm:$0xf]
    %v325 = vld [vmem:[#allocation6 + $0x34] sm:$0xf]
    %v326 = vld [vmem:[#allocation6 + $0x38] sm:$0xf]
    %v327 = vld [vmem:[#allocation6 + $0x3c] sm:$0xf]
    %v328 = vld [vmem:[#allocation6 + $0x40] sm:$0xf]
    %v329 = vld [vmem:[#allocation6 + $0x44] sm:$0xf]
    %v330 = vld [vmem:[#allocation6 + $0x48] sm:$0xf]
    %v331 = vld [vmem:[#allocation6 + $0x4c] sm:$0xf]
    %v332 = vld [vmem:[#allocation6 + $0x50] sm:$0xf]
    %v333 = vld [vmem:[#allocation6 + $0x54] sm:$0xf]
    %v334 = vld [vmem:[#allocation6 + $0x58] sm:$0xf]
    %v335 = vld [vmem:[#allocation6 + $0x5c] sm:$0xf]
    %v336 = vld [vmem:[#allocation6 + $0x60] sm:$0xf]
    %v337 = vld [vmem:[#allocation6 + $0x64] sm:$0xf]
    %v338 = vld [vmem:[#allocation6 + $0x68] sm:$0xf]
    %v339 = vld [vmem:[#allocation6 + $0x6c] sm:$0xf]
    %v340 = vld [vmem:[#allocation6 + $0x70] sm:$0xf]
    %v341 = vld [vmem:[#allocation6 + $0x74] sm:$0xf]
    %v342 = vld [vmem:[#allocation6 + $0x78] sm:$0xf]
    %v343 = vld [vmem:[#allocation6 + $0x7c] sm:$0xf]
    %v344 = vld [vmem:[%s6] sm:$0x1]
    %v346 = vperm.slane %v344, 0
    %v380 = vunpack.c.l.b16 %v312
    %v381 = vunpack.c.l.b16 %v313
    %v382 = vunpack.c.l.b16 %v314
    %v383 = vunpack.c.l.b16 %v315
    %v384 = vunpack.c.l.b16 %v316
    %v385 = vunpack.c.l.b16 %v317
    %v386 = vunpack.c.l.b16 %v318
    %v387 = vunpack.c.l.b16 %v319
    %v388 = vunpack.c.l.b16 %v320
    %v389 = vunpack.c.l.b16 %v321
    %v390 = vunpack.c.l.b16 %v322
    %v391 = vunpack.c.l.b16 %v323
    %v392 = vunpack.c.l.b16 %v324
    %v393 = vunpack.c.l.b16 %v325
    %v394 = vunpack.c.l.b16 %v326
    %v395 = vunpack.c.l.b16 %v327
    %v396 = vunpack.c.l.b16 %v328
    %v397 = vunpack.c.l.b16 %v329
    %v398 = vunpack.c.l.b16 %v330
    %v399 = vunpack.c.l.b16 %v331
    %v400 = vunpack.c.l.b16 %v332
    %v401 = vunpack.c.l.b16 %v333
    %v402 = vunpack.c.l.b16 %v334
    %v403 = vunpack.c.l.b16 %v335
    %v404 = vunpack.c.l.b16 %v336
    %v405 = vunpack.c.l.b16 %v337
    %v406 = vunpack.c.l.b16 %v338
    %v407 = vunpack.c.l.b16 %v339
    %v408 = vunpack.c.l.b16 %v340
    %v409 = vunpack.c.l.b16 %v341
    %v410 = vunpack.c.l.b16 %v342
    %v411 = vunpack.c.l.b16 %v343
    %v412 = vpack.c.b16 %v381, %v380
    %v413 = vpack.c.b16 %v383, %v382
    %v414 = vpack.c.b16 %v385, %v384
    %v415 = vpack.c.b16 %v387, %v386
    %v416 = vpack.c.b16 %v389, %v388
    %v417 = vpack.c.b16 %v391, %v390
    %v418 = vpack.c.b16 %v393, %v392
    %v419 = vpack.c.b16 %v395, %v394
    %v420 = vpack.c.b16 %v397, %v396
    %v421 = vpack.c.b16 %v399, %v398
    %v422 = vpack.c.b16 %v401, %v400
    %v423 = vpack.c.b16 %v403, %v402
    %v424 = vpack.c.b16 %v405, %v404
    %v425 = vpack.c.b16 %v407, %v406
    %v426 = vpack.c.b16 %v409, %v408
    %v427 = vpack.c.b16 %v411, %v410
    %444 = vmatpush.bf16.msra.mxu0 %v419
    %445 = vmatpush.bf16.msra.mxu0 %v418
    %446 = vmatpush.bf16.msra.mxu0 %v417
    %447 = vmatpush.bf16.msra.mxu0 %v416
    %448 = vmatpush.bf16.msra.mxu0 %v415
    %449 = vmatpush.bf16.msra.mxu0 %v414
    %450 = vmatpush.bf16.msra.mxu0 %v413
    %451 = vmatpush.bf16.msra.mxu0 %v412
    %452 = vmatmul.bf16.gmra.mxu0 %v310
    %v453 = vpop.f32.mrf.mxu0
    %v454 = vadd.f32 %v346, %v453
    %v455 = vpop.f32.mrf.mxu0
    %456 = vdwg.mxu0
    %457 = vmatpush.bf16.msra.mxu0 %v427
    %458 = vmatpush.bf16.msra.mxu0 %v426
    %459 = vmatpush.bf16.msra.mxu0 %v425
    %460 = vmatpush.bf16.msra.mxu0 %v424
    %461 = vmatpush.bf16.msra.mxu0 %v423
    %462 = vmatpush.bf16.msra.mxu0 %v422
    %463 = vmatpush.bf16.msra.mxu0 %v421
    %464 = vmatpush.bf16.msra.mxu0 %v420
    %465 = vmatmul.bf16.gmra.mxu0 %v311
    %v466 = vpop.f32.mrf.mxu0
    %v467 = vadd.f32 %v454, %v466
    %v468 = vpop.f32.mrf.mxu0
    %469 = vdwg.mxu0
    %v470 = vmax.f32 %v467, 0.0
    %v471 = vpack.c.bf16 %v470, %v470
    %v472 = vld [vmem:[#allocation7] sm:$0xf]
    %v473 = vld [vmem:[#allocation7 + $0x4] sm:$0xf]
    %v474 = vld [vmem:[#allocation7 + $0x8] sm:$0xf]
    %v475 = vld [vmem:[#allocation7 + $0xc] sm:$0xf]
    %v476 = vld [vmem:[#allocation7 + $0x10] sm:$0xf]
    %v477 = vld [vmem:[#allocation7 + $0x14] sm:$0xf]
    %v478 = vld [vmem:[#allocation7 + $0x18] sm:$0xf]
    %v479 = vld [vmem:[#allocation7 + $0x1c] sm:$0xf]
    %v480 = vld [vmem:[#allocation7 + $0x20] sm:$0xf]
    %v481 = vld [vmem:[#allocation7 + $0x24] sm:$0xf]
    %v482 = vld [vmem:[#allocation7 + $0x28] sm:$0xf]
    %v483 = vld [vmem:[#allocation7 + $0x2c] sm:$0xf]
    %v484 = vld [vmem:[#allocation7 + $0x30] sm:$0xf]
    %v485 = vld [vmem:[#allocation7 + $0x34] sm:$0xf]
    %v486 = vld [vmem:[#allocation7 + $0x38] sm:$0xf]
    %v487 = vld [vmem:[#allocation7 + $0x3c] sm:$0xf]
    %v488 = vld [vmem:[%s8] sm:$0x1]
    %v490 = vperm.slane %v488, 0
    %v508 = vunpack.c.l.b16 %v472
    %v509 = vunpack.c.l.b16 %v473
    %v510 = vunpack.c.l.b16 %v474
    %v511 = vunpack.c.l.b16 %v475
    %v512 = vunpack.c.l.b16 %v476
    %v513 = vunpack.c.l.b16 %v477
    %v514 = vunpack.c.l.b16 %v478
    %v515 = vunpack.c.l.b16 %v479
    %v516 = vunpack.c.l.b16 %v480
    %v517 = vunpack.c.l.b16 %v481
    %v518 = vunpack.c.l.b16 %v482
    %v519 = vunpack.c.l.b16 %v483
    %v520 = vunpack.c.l.b16 %v484
    %v521 = vunpack.c.l.b16 %v485
    %v522 = vunpack.c.l.b16 %v486
    %v523 = vunpack.c.l.b16 %v487
    %v524 = vpack.c.b16 %v509, %v508
    %v525 = vpack.c.b16 %v511, %v510
    %v526 = vpack.c.b16 %v513, %v512
    %v527 = vpack.c.b16 %v515, %v514
    %v528 = vpack.c.b16 %v517, %v516
    %v529 = vpack.c.b16 %v519, %v518
    %v530 = vpack.c.b16 %v521, %v520
    %v531 = vpack.c.b16 %v523, %v522
    %540 = vmatpush.bf16.msra.mxu0 %v531
    %541 = vmatpush.bf16.msra.mxu0 %v530
    %542 = vmatpush.bf16.msra.mxu0 %v529
    %543 = vmatpush.bf16.msra.mxu0 %v528
    %544 = vmatpush.bf16.msra.mxu0 %v527
    %545 = vmatpush.bf16.msra.mxu0 %v526
    %546 = vmatpush.bf16.msra.mxu0 %v525
    %547 = vmatpush.bf16.msra.mxu0 %v524
    %548 = vmatmul.bf16.gmra.mxu0 %v471
    %v549 = vpop.f32.mrf.mxu0
    %v550 = vadd.f32 %v490, %v549
    %v551 = vpop.f32.mrf.mxu0
    %552 = vdwg.mxu0
    %553 = vmax.xlane.f32.xlu0 %v550
    %v554 = vpop.xlane.xlu0 %553
    %v555 = vsub.f32 %v550, %v554
    %v556 = vmul.f32 %v555, 1.442695
    %v557 = vpow.pop %v556
    %558 = vadd.xlane.f32.xlu0 %v557
    %v559 = vpop.xlane.xlu0 %558
    %v560 = vrcp.pop %v559
    %v561 = vmul.f32 %v559, %v560
    %v562 = vsub.f32 1.0, %v561
    %v563 = vmul.f32 %v560, %v562
    %v564 = vadd.f32 %v560, %v563
    %vm565 = vweird.f32 %v559
    %vm566 = vweird.f32 %v560
    %vm567 = vmor %vm565, %vm566
    %v568 = vsel %vm567, %v560, %v564
    %v569 = vand.u32 2147483647, %v559
    %vm570 = vcmp.eq.f32.partialorder %v569, 8.507059e+37
    %v571 = vand.u32 %v559, 2147483648
    %v572 = vor.u32 1.1754944e-38, %v571
    %v573 = vsel %vm570, %v572, %v568
    %v574 = vmul.f32 %v557, %v573
    %575 = vst [vmem:[%s9] sm:$0xff] %v574
    // Predicated region
    $region54: #{fdpnn_forward.1} parent=1 // pred_check
      _
    $region55: #{fdpnn_forward.1} parent=1 // pred_check_branch
      %577 = sbr.rel (0) target = $region57
    $region56: #{fdpnn_forward.1} parent=1 // pred_region
      _
    $region57: #{fdpnn_forward.1} parent=1 // pred_fallthru
      _
    // Predicated region
    $region58: #{fdpnn_forward.1} parent=1 // pred_check
      _
    $region59: #{fdpnn_forward.1} parent=1 // pred_check_branch
      %579 = sbr.rel (0) target = $region61
    $region60: #{fdpnn_forward.1} parent=1 // pred_region
      _
    $region61: #{fdpnn_forward.1} parent=1 // pred_fallthru
      _
    %580 = vsyncpa [#allocation3], 1
    %581 = vsyncpa [#allocation5], 1
    %582 = vsyncpa [#allocation8], 1

</llo_original>
